<compile_context>
chip_gen: v5e
topology: v5e:2x2
jax: 0.10.0
libtpu: 0.0.40
codegen_flags: <defaults>
</compile_context>

<pallas_src>
import functools

import jax
import jax.numpy as jnp
from jax.experimental import pallas as pl
from jax.experimental.pallas import tpu as pltpu

HIDDEN = 256
LOG_STD_MIN = -20.0
LOG_STD_MAX = 2.0
LANE = 128
ROW_ALIGN = 16          # sublane alignment valid for both f32 (8) and bf16 (16) tiles


def _round_up(x, m):
    return (x + m - 1) // m * m


def actor_kernel(s_ref, w1_ref, b1_ref, w2_ref, b2_ref, w3_ref, b3_ref,
                 out_ref, *, action_dim):
    """One TB-row batch tile of the Actor forward.

    Writes a lane-dense combined tile:
      lanes [0, action_dim)            -> mean
      lanes [action_dim, 2*action_dim) -> std = exp(clip(log_std, -20, 2))
      lanes [2*action_dim, OUT_PAD)    -> padding (ignored by the wrapper)
    """
    wdt = w1_ref.dtype            # MXU operand dtype (bf16 default, f32 supported)
    x = s_ref[...]

    # Layer 1: Linear + ReLU  (MXU bf16 operands, f32 accumulate; elementwise f32)
    h1 = jnp.dot(x.astype(wdt), w1_ref[...],
                 preferred_element_type=jnp.float32) + b1_ref[...]
    h1 = jnp.maximum(h1, 0.0)
    # Layer 2: Linear + ReLU
    h2 = jnp.dot(h1.astype(wdt), w2_ref[...],
                 preferred_element_type=jnp.float32) + b2_ref[...]
    h2 = jnp.maximum(h2, 0.0)
    # Output layer (lane-padded head)
    out = jnp.dot(h2.astype(wdt), w3_ref[...],
                  preferred_element_type=jnp.float32) + b3_ref[...]

    # Combined lane-dense store: mean in the low lanes, std everywhere else.
    # exp over the whole tile runs on the EUP slot (free next to the MXU work);
    # the clip keeps the mean lanes finite before they are overwritten by where.
    col = jax.lax.broadcasted_iota(jnp.int32, out.shape, dimension=1)
    std_all = jnp.exp(jnp.clip(out, LOG_STD_MIN, LOG_STD_MAX))
    combined = jnp.where(col < action_dim, out, std_all)
    out_ref[...] = combined.astype(out_ref.dtype)


def actor_forward(state, params, *, tb=None, out_dtype=None):
    """state: [B, state_dim] f32 -> (mean [B, action_dim] f32, std [B, action_dim] f32)."""
    w1, b1, w2, b2, w3, b3 = params
    B, state_dim = state.shape
    out_features = w3.shape[1]
    action_dim = out_features // 2

    # Combined-tile write dtype: match bf16 weights by default (halves the
    # largest HBM stream); the wrapper upcasts to f32 after slicing.
    if out_dtype is None:
        out_dtype = jnp.bfloat16 if w1.dtype == jnp.bfloat16 else jnp.float32
    out_dtype = jnp.dtype(out_dtype)

    # ---- lane-dense head: pad W3/b3 out-features to a full 128-lane group ----
    out_pad = _round_up(max(out_features, LANE), LANE)
    if out_pad != out_features:
        w3p = jnp.pad(w3, ((0, 0), (0, out_pad - out_features)))
        b3p = jnp.pad(b3, ((0, 0), (0, out_pad - out_features)))
    else:
        w3p, b3p = w3, b3

    # ---- batch tiling ----
    # Small B: one tile (call is overhead-bound anyway).
    # Large B: big tiles (cap 4096) to amortize per-step overhead, but keep the
    # grid >= 2 steps so v7x's two TensorCores both get work ("parallel" axis).
    if tb is None:
        if B < 256:
            tb = _round_up(B, ROW_ALIGN)
        else:
            tb = min(4096, _round_up(pl.cdiv(B, 2), ROW_ALIGN))
    tb = max(ROW_ALIGN, _round_up(tb, ROW_ALIGN))
    bp = _round_up(B, tb)
    state_p = jnp.pad(state, ((0, bp - B), (0, 0))) if bp != B else state
    grid = (bp // tb,)

    wbytes = sum(int(a.size) * a.dtype.itemsize for a in (w1, b1, w2, b2, w3p, b3p))
    flops = 2 * bp * (state_dim * HIDDEN + HIDDEN * HIDDEN + HIDDEN * out_pad)
    bytes_accessed = (int(state_p.size) * state_p.dtype.itemsize
                      + wbytes
                      + bp * out_pad * out_dtype.itemsize)

    # VMEM estimate: double-buffered state + output streams, single-buffered weights.
    vmem_est = (2 * tb * state_dim * state_p.dtype.itemsize
                + 2 * tb * out_pad * out_dtype.itemsize
                + wbytes)
    vmem_limit = None
    if vmem_est > 12 * 1024 * 1024:          # only relevant for very large explicit tb
        vmem_limit = min(int(vmem_est * 3 // 2), 64 * 1024 * 1024)

    def build(single_buffer_weights):
        def resident(arr):
            # full-array block, constant index_map -> DMA'd once, VMEM-resident
            if single_buffer_weights:
                return pl.BlockSpec(arr.shape, lambda i: (0,) * arr.ndim,
                                    pipeline_mode=pl.Buffered(1))
            return pl.BlockSpec(arr.shape, lambda i: (0,) * arr.ndim)

        return pl.pallas_call(
            functools.partial(actor_kernel, action_dim=action_dim),
            out_shape=jax.ShapeDtypeStruct((bp, out_pad), out_dtype),
            grid=grid,
            in_specs=[
                pl.BlockSpec((tb, state_dim), lambda i: (i, 0)),   # streamed
                resident(w1), resident(b1),
                resident(w2), resident(b2),
                resident(w3p), resident(b3p),
            ],
            out_specs=pl.BlockSpec((tb, out_pad), lambda i: (i, 0)),
            compiler_params=pltpu.CompilerParams(
                dimension_semantics=("parallel",),
                vmem_limit_bytes=vmem_limit),
            cost_estimate=pl.CostEstimate(
                flops=flops,
                transcendentals=bp * out_pad,
                bytes_accessed=bytes_accessed),
        )

    try:
        combined = build(True)(state_p, w1, b1, w2, b2, w3p, b3p)
    except Exception:
        # Fallback if this JAX build rejects pipeline_mode=pl.Buffered(1) on
        # constant-index resident blocks (costs only ~0.2-0.8 MB extra VMEM).
        combined = build(False)(state_p, w1, b1, w2, b2, w3p, b3p)

    mean = combined[:B, :action_dim].astype(jnp.float32)
    std = combined[:B, action_dim:2 * action_dim].astype(jnp.float32)
    return mean, std


def init_actor_params(key, state_dim, action_dim, weight_dtype=jnp.bfloat16):
    """Deterministic init mirroring PyTorch orthogonal_(gain=1) + zero bias.

    Weights stored as [in, out] (y = x @ W + b), default bf16 (MXU operands);
    biases kept f32 as [1, H] 2-D VMEM tiles (VPU/EUP path stays f32).
    """
    k1, k2, k3 = jax.random.split(key, 3)
    ortho = jax.nn.initializers.orthogonal(scale=1.0)
    w1 = ortho(k1, (state_dim, HIDDEN), jnp.float32).astype(weight_dtype)
    b1 = jnp.zeros((1, HIDDEN), jnp.float32)
    w2 = ortho(k2, (HIDDEN, HIDDEN), jnp.float32).astype(weight_dtype)
    b2 = jnp.zeros((1, HIDDEN), jnp.float32)
    w3 = ortho(k3, (HIDDEN, action_dim * 2), jnp.float32).astype(weight_dtype)
    b3 = jnp.zeros((1, action_dim * 2), jnp.float32)
    return (w1, b1, w2, b2, w3, b3)


def params_to_bf16(params):
    """Cast weights to bf16 (MXU operands), keep biases f32."""
    w1, b1, w2, b2, w3, b3 = params
    return (w1.astype(jnp.bfloat16), b1,
            w2.astype(jnp.bfloat16), b2,
            w3.astype(jnp.bfloat16), b3)


def actor_forward_ref(state, params):
    """Pure-JAX reference (matmul operands in weight dtype, f32 accumulation)."""
    w1, b1, w2, b2, w3, b3 = params
    wdt = w1.dtype
    h1 = jnp.maximum(jnp.dot(state.astype(wdt), w1,
                             preferred_element_type=jnp.float32) + b1, 0.0)
    h2 = jnp.maximum(jnp.dot(h1.astype(wdt), w2,
                             preferred_element_type=jnp.float32) + b2, 0.0)
    out = jnp.dot(h2.astype(wdt), w3,
                  preferred_element_type=jnp.float32) + b3
    action_dim = w3.shape[1] // 2
    mean = out[:, :action_dim]
    log_std = jnp.clip(out[:, action_dim:], LOG_STD_MIN, LOG_STD_MAX)
    return mean, jnp.exp(log_std)


if __name__ == "__main__":
    key = jax.random.PRNGKey(0)
    k_params, k_state, k_big = jax.random.split(key, 3)

    state_dim = 8       # ball-plate system state
    action_dim = 2      # plate tilt angles
    action_bound = 1.0  # only used by select_action (tanh(mean)*bound), not forward

    # --- exactness check: f32-weight path vs pure-JAX reference ---
    params_f32 = init_actor_params(k_params, state_dim, action_dim,
                                   weight_dtype=jnp.float32)
    state_small = jax.random.normal(k_state, (2, state_dim), jnp.float32)
    mean, std = actor_forward(state_small, params_f32)
    jax.block_until_ready((mean, std))
    mean_r, std_r = actor_forward_ref(state_small, params_f32)
    assert mean.shape == (2, action_dim) and std.shape == (2, action_dim)
    assert jnp.allclose(mean, mean_r, atol=1e-4, rtol=1e-4)
    assert jnp.allclose(std, std_r, atol=1e-4, rtol=1e-4)

    # --- default bf16-weight path (MXU-friendly), streamed batch B=1000 ---
    #     tb = 512 -> grid=2 (keeps both v7x TensorCores busy), bf16 writeback
    params = params_to_bf16(params_f32)
    state_big = jax.random.normal(k_big, (1000, state_dim), jnp.float32)
    mean_b, std_b = actor_forward(state_big, params)
    jax.block_until_ready((mean_b, std_b))
    mean_br, std_br = actor_forward_ref(state_big, params)
    assert mean_b.shape == (1000, action_dim) and std_b.shape == (1000, action_dim)
    assert jnp.allclose(mean_b, mean_br, atol=5e-2, rtol=5e-2)
    assert jnp.allclose(std_b, std_br, atol=5e-2, rtol=5e-2)

    # --- default bf16 path at the per-control-step inference shape (B=2) ---
    mean_s, std_s = actor_forward(state_small, params)
    jax.block_until_ready((mean_s, std_s))
    mean_sr, std_sr = actor_forward_ref(state_small, params)
    assert mean_s.shape == (2, action_dim) and std_s.shape == (2, action_dim)
    assert jnp.allclose(mean_s, mean_sr, atol=5e-2, rtol=5e-2)
    assert jnp.allclose(std_s, std_sr, atol=5e-2, rtol=5e-2)

    print("KERNEL_OK")
</pallas_src>

<mosaic_0001>
module attributes {stable_mosaic.version = 11 : i64} {
  func.func @actor_kernel(%arg0: i32, %arg1: memref<16x8xf32, #tpu.memory_space<vmem>>, %arg2: memref<8x256xf32, #tpu.memory_space<vmem>>, %arg3: memref<1x256xf32, #tpu.memory_space<vmem>>, %arg4: memref<256x256xf32, #tpu.memory_space<vmem>>, %arg5: memref<1x256xf32, #tpu.memory_space<vmem>>, %arg6: memref<256x128xf32, #tpu.memory_space<vmem>>, %arg7: memref<1x128xf32, #tpu.memory_space<vmem>>, %arg8: memref<16x128xf32, #tpu.memory_space<vmem>>) attributes {dimension_semantics = [#tpu.dimension_semantics<parallel>], iteration_bounds = array<i64: 1>, scalar_prefetch = 0 : i64, scratch_operands = 0 : i64, tpu.core_type = #tpu.core_type<tc>, window_params = [{transform_indices = @transform_0, window_bounds = array<i64: 16, 8>}, {pipeline_mode = #tpu.pipeline_mode<synchronous>, transform_indices = @transform_1, window_bounds = array<i64: 8, 256>}, {pipeline_mode = #tpu.pipeline_mode<synchronous>, transform_indices = @transform_2, window_bounds = array<i64: 1, 256>}, {pipeline_mode = #tpu.pipeline_mode<synchronous>, transform_indices = @transform_3, window_bounds = array<i64: 256, 256>}, {pipeline_mode = #tpu.pipeline_mode<synchronous>, transform_indices = @transform_4, window_bounds = array<i64: 1, 256>}, {pipeline_mode = #tpu.pipeline_mode<synchronous>, transform_indices = @transform_5, window_bounds = array<i64: 256, 128>}, {pipeline_mode = #tpu.pipeline_mode<synchronous>, transform_indices = @transform_6, window_bounds = array<i64: 1, 128>}, {transform_indices = @transform_7, window_bounds = array<i64: 16, 128>}]} {
    %c0 = arith.constant 0 : index
    %c0_0 = arith.constant 0 : index
    %0 = vector.load %arg1[%c0, %c0_0] : memref<16x8xf32, #tpu.memory_space<vmem>>, vector<16x8xf32>
    %c0_1 = arith.constant 0 : index
    %c0_2 = arith.constant 0 : index
    %1 = vector.load %arg2[%c0_1, %c0_2] : memref<8x256xf32, #tpu.memory_space<vmem>>, vector<8x256xf32>
    %cst = arith.constant dense<0.000000e+00> : vector<16x256xf32>
    %2 = tpu.matmul %0, %1, %cst {dimension_numbers = #tpu.dot_dimension_numbers<[1], [0], [0], [1], [0, 0, 1, 1], [], []>} : vector<16x8xf32>, vector<8x256xf32>, vector<16x256xf32> -> vector<16x256xf32>
    %c0_3 = arith.constant 0 : index
    %c0_4 = arith.constant 0 : index
    %3 = vector.load %arg3[%c0_3, %c0_4] : memref<1x256xf32, #tpu.memory_space<vmem>>, vector<1x256xf32>
    %4 = vector.broadcast %3 : vector<1x256xf32> to vector<16x256xf32>
    %5 = arith.addf %2, %4 : vector<16x256xf32>
    %cst_5 = arith.constant 0.000000e+00 : f32
    %6 = vector.broadcast %cst_5 : f32 to vector<16x256xf32>
    %7 = arith.maximumf %5, %6 : vector<16x256xf32>
    %c0_6 = arith.constant 0 : index
    %c0_7 = arith.constant 0 : index
    %8 = vector.load %arg4[%c0_6, %c0_7] : memref<256x256xf32, #tpu.memory_space<vmem>>, vector<256x256xf32>
    %cst_8 = arith.constant dense<0.000000e+00> : vector<16x256xf32>
    %9 = tpu.matmul %7, %8, %cst_8 {dimension_numbers = #tpu.dot_dimension_numbers<[1], [0], [0], [1], [0, 0, 1, 1], [], []>} : vector<16x256xf32>, vector<256x256xf32>, vector<16x256xf32> -> vector<16x256xf32>
    %c0_9 = arith.constant 0 : index
    %c0_10 = arith.constant 0 : index
    %10 = vector.load %arg5[%c0_9, %c0_10] : memref<1x256xf32, #tpu.memory_space<vmem>>, vector<1x256xf32>
    %11 = vector.broadcast %10 : vector<1x256xf32> to vector<16x256xf32>
    %12 = arith.addf %9, %11 : vector<16x256xf32>
    %cst_11 = arith.constant 0.000000e+00 : f32
    %13 = vector.broadcast %cst_11 : f32 to vector<16x256xf32>
    %14 = arith.maximumf %12, %13 : vector<16x256xf32>
    %c0_12 = arith.constant 0 : index
    %c0_13 = arith.constant 0 : index
    %15 = vector.load %arg6[%c0_12, %c0_13] : memref<256x128xf32, #tpu.memory_space<vmem>>, vector<256x128xf32>
    %cst_14 = arith.constant dense<0.000000e+00> : vector<16x128xf32>
    %16 = tpu.matmul %14, %15, %cst_14 {dimension_numbers = #tpu.dot_dimension_numbers<[1], [0], [0], [1], [0, 0, 1, 1], [], []>} : vector<16x256xf32>, vector<256x128xf32>, vector<16x128xf32> -> vector<16x128xf32>
    %c0_15 = arith.constant 0 : index
    %c0_16 = arith.constant 0 : index
    %17 = vector.load %arg7[%c0_15, %c0_16] : memref<1x128xf32, #tpu.memory_space<vmem>>, vector<1x128xf32>
    %18 = vector.broadcast %17 : vector<1x128xf32> to vector<16x128xf32>
    %19 = arith.addf %16, %18 : vector<16x128xf32>
    %20 = tpu.iota {dimensions = array<i32: 1>} : vector<16x128xi32>
    %cst_17 = arith.constant -2.000000e+01 : f32
    %cst_18 = arith.constant 2.000000e+00 : f32
    %21 = vector.broadcast %cst_17 : f32 to vector<16x128xf32>
    %22 = arith.maximumf %21, %19 : vector<16x128xf32>
    %23 = vector.broadcast %cst_18 : f32 to vector<16x128xf32>
    %24 = arith.minimumf %23, %22 : vector<16x128xf32>
    %25 = math.exp %24 : vector<16x128xf32>
    %c2_i32 = arith.constant 2 : i32
    %26 = vector.broadcast %c2_i32 : i32 to vector<16x128xi32>
    %27 = arith.cmpi slt, %20, %26 : vector<16x128xi32>
    %28 = arith.select %27, %19, %25 : vector<16x128xi1>, vector<16x128xf32>
    %c0_19 = arith.constant 0 : index
    %c0_20 = arith.constant 0 : index
    %29 = vector.load %arg8[%c0_19, %c0_20] : memref<16x128xf32, #tpu.memory_space<vmem>>, vector<16x128xf32>
    tpu.vector_store %arg8[%c0_19, %c0_20], %28 {strides = array<i32>} : memref<16x128xf32, #tpu.memory_space<vmem>>, vector<16x128xf32>,
    return
  }
  func.func @transform_0(%arg0: i32) -> (i32, i32) {
    %c0_i32 = arith.constant 0 : i32
    %c0_i32_0 = arith.constant 0 : i32
    return %arg0, %c0_i32 : i32, i32
  }
  func.func @transform_1(%arg0: i32) -> (i32, i32) {
    %c0_i32 = arith.constant 0 : i32
    %c0_i32_0 = arith.constant 0 : i32
    %c0_i32_1 = arith.constant 0 : i32
    return %c0_i32, %c0_i32_0 : i32, i32
  }
  func.func @transform_2(%arg0: i32) -> (i32, i32) {
    %c0_i32 = arith.constant 0 : i32
    %c0_i32_0 = arith.constant 0 : i32
    %c0_i32_1 = arith.constant 0 : i32
    return %c0_i32, %c0_i32_0 : i32, i32
  }
  func.func @transform_3(%arg0: i32) -> (i32, i32) {
    %c0_i32 = arith.constant 0 : i32
    %c0_i32_0 = arith.constant 0 : i32
    %c0_i32_1 = arith.constant 0 : i32
    return %c0_i32, %c0_i32_0 : i32, i32
  }
  func.func @transform_4(%arg0: i32) -> (i32, i32) {
    %c0_i32 = arith.constant 0 : i32
    %c0_i32_0 = arith.constant 0 : i32
    %c0_i32_1 = arith.constant 0 : i32
    return %c0_i32, %c0_i32_0 : i32, i32
  }
  func.func @transform_5(%arg0: i32) -> (i32, i32) {
    %c0_i32 = arith.constant 0 : i32
    %c0_i32_0 = arith.constant 0 : i32
    %c0_i32_1 = arith.constant 0 : i32
    return %c0_i32, %c0_i32_0 : i32, i32
  }
  func.func @transform_6(%arg0: i32) -> (i32, i32) {
    %c0_i32 = arith.constant 0 : i32
    %c0_i32_0 = arith.constant 0 : i32
    %c0_i32_1 = arith.constant 0 : i32
    return %c0_i32, %c0_i32_0 : i32, i32
  }
  func.func @transform_7(%arg0: i32) -> (i32, i32) {
    %c0_i32 = arith.constant 0 : i32
    %c0_i32_0 = arith.constant 0 : i32
    return %arg0, %c0_i32 : i32, i32
  }
}

module attributes {stable_mosaic.version = 11 : i64} {
  func.func @actor_kernel(%arg0: i32, %arg1: memref<16x8xf32, #tpu.memory_space<vmem>>, %arg2: memref<8x256xf32, #tpu.memory_space<vmem>>, %arg3: memref<1x256xf32, #tpu.memory_space<vmem>>, %arg4: memref<256x256xf32, #tpu.memory_space<vmem>>, %arg5: memref<1x256xf32, #tpu.memory_space<vmem>>, %arg6: memref<256x128xf32, #tpu.memory_space<vmem>>, %arg7: memref<1x128xf32, #tpu.memory_space<vmem>>, %arg8: memref<16x128xf32, #tpu.memory_space<vmem>>) attributes {dimension_semantics = [#tpu.dimension_semantics<parallel>], iteration_bounds = array<i64: 1>, scalar_prefetch = 0 : i64, scratch_operands = 0 : i64, tpu.core_type = #tpu.core_type<tc>, window_params = [{transform_indices = @transform_0, window_bounds = array<i64: 16, 8>}, {pipeline_mode = #tpu.pipeline_mode<synchronous>, transform_indices = @transform_1, window_bounds = array<i64: 8, 256>}, {pipeline_mode = #tpu.pipeline_mode<synchronous>, transform_indices = @transform_2, window_bounds = array<i64: 1, 256>}, {pipeline_mode = #tpu.pipeline_mode<synchronous>, transform_indices = @transform_3, window_bounds = array<i64: 256, 256>}, {pipeline_mode = #tpu.pipeline_mode<synchronous>, transform_indices = @transform_4, window_bounds = array<i64: 1, 256>}, {pipeline_mode = #tpu.pipeline_mode<synchronous>, transform_indices = @transform_5, window_bounds = array<i64: 256, 128>}, {pipeline_mode = #tpu.pipeline_mode<synchronous>, transform_indices = @transform_6, window_bounds = array<i64: 1, 128>}, {transform_indices = @transform_7, window_bounds = array<i64: 16, 128>}]} {
    %c0 = arith.constant 0 : index
    %c0_0 = arith.constant 0 : index
    %0 = vector.load %arg1[%c0, %c0_0] : memref<16x8xf32, #tpu.memory_space<vmem>>, vector<16x8xf32>
    %c0_1 = arith.constant 0 : index
    %c0_2 = arith.constant 0 : index
    %1 = vector.load %arg2[%c0_1, %c0_2] : memref<8x256xf32, #tpu.memory_space<vmem>>, vector<8x256xf32>
    %cst = arith.constant dense<0.000000e+00> : vector<16x256xf32>
    %2 = tpu.matmul %0, %1, %cst {dimension_numbers = #tpu.dot_dimension_numbers<[1], [0], [0], [1], [0, 0, 1, 1], [], []>} : vector<16x8xf32>, vector<8x256xf32>, vector<16x256xf32> -> vector<16x256xf32>
    %c0_3 = arith.constant 0 : index
    %c0_4 = arith.constant 0 : index
    %3 = vector.load %arg3[%c0_3, %c0_4] : memref<1x256xf32, #tpu.memory_space<vmem>>, vector<1x256xf32>
    %4 = vector.broadcast %3 : vector<1x256xf32> to vector<16x256xf32>
    %5 = arith.addf %2, %4 : vector<16x256xf32>
    %cst_5 = arith.constant 0.000000e+00 : f32
    %6 = vector.broadcast %cst_5 : f32 to vector<16x256xf32>
    %7 = arith.maximumf %5, %6 : vector<16x256xf32>
    %c0_6 = arith.constant 0 : index
    %c0_7 = arith.constant 0 : index
    %8 = vector.load %arg4[%c0_6, %c0_7] : memref<256x256xf32, #tpu.memory_space<vmem>>, vector<256x256xf32>
    %cst_8 = arith.constant dense<0.000000e+00> : vector<16x256xf32>
    %9 = tpu.matmul %7, %8, %cst_8 {dimension_numbers = #tpu.dot_dimension_numbers<[1], [0], [0], [1], [0, 0, 1, 1], [], []>} : vector<16x256xf32>, vector<256x256xf32>, vector<16x256xf32> -> vector<16x256xf32>
    %c0_9 = arith.constant 0 : index
    %c0_10 = arith.constant 0 : index
    %10 = vector.load %arg5[%c0_9, %c0_10] : memref<1x256xf32, #tpu.memory_space<vmem>>, vector<1x256xf32>
    %11 = vector.broadcast %10 : vector<1x256xf32> to vector<16x256xf32>
    %12 = arith.addf %9, %11 : vector<16x256xf32>
    %cst_11 = arith.constant 0.000000e+00 : f32
    %13 = vector.broadcast %cst_11 : f32 to vector<16x256xf32>
    %14 = arith.maximumf %12, %13 : vector<16x256xf32>
    %c0_12 = arith.constant 0 : index
    %c0_13 = arith.constant 0 : index
    %15 = vector.load %arg6[%c0_12, %c0_13] : memref<256x128xf32, #tpu.memory_space<vmem>>, vector<256x128xf32>
    %cst_14 = arith.constant dense<0.000000e+00> : vector<16x128xf32>
    %16 = tpu.matmul %14, %15, %cst_14 {dimension_numbers = #tpu.dot_dimension_numbers<[1], [0], [0], [1], [0, 0, 1, 1], [], []>} : vector<16x256xf32>, vector<256x128xf32>, vector<16x128xf32> -> vector<16x128xf32>
    %c0_15 = arith.constant 0 : index
    %c0_16 = arith.constant 0 : index
    %17 = vector.load %arg7[%c0_15, %c0_16] : memref<1x128xf32, #tpu.memory_space<vmem>>, vector<1x128xf32>
    %18 = vector.broadcast %17 : vector<1x128xf32> to vector<16x128xf32>
    %19 = arith.addf %16, %18 : vector<16x128xf32>
    %20 = tpu.iota {dimensions = array<i32: 1>} : vector<16x128xi32>
    %cst_17 = arith.constant -2.000000e+01 : f32
    %cst_18 = arith.constant 2.000000e+00 : f32
    %21 = vector.broadcast %cst_17 : f32 to vector<16x128xf32>
    %22 = arith.maximumf %21, %19 : vector<16x128xf32>
    %23 = vector.broadcast %cst_18 : f32 to vector<16x128xf32>
    %24 = arith.minimumf %23, %22 : vector<16x128xf32>
    %25 = math.exp %24 : vector<16x128xf32>
    %c2_i32 = arith.constant 2 : i32
    %26 = vector.broadcast %c2_i32 : i32 to vector<16x128xi32>
    %27 = arith.cmpi slt, %20, %26 : vector<16x128xi32>
    %28 = arith.select %27, %19, %25 : vector<16x128xi1>, vector<16x128xf32>
    %c0_19 = arith.constant 0 : index
    %c0_20 = arith.constant 0 : index
    %29 = vector.load %arg8[%c0_19, %c0_20] : memref<16x128xf32, #tpu.memory_space<vmem>>, vector<16x128xf32>
    tpu.vector_store %arg8[%c0_19, %c0_20], %28 {strides = array<i32>} : memref<16x128xf32, #tpu.memory_space<vmem>>, vector<16x128xf32>,
    return
  }
  func.func @transform_0(%arg0: i32) -> (i32, i32) {
    %c0_i32 = arith.constant 0 : i32
    %c0_i32_0 = arith.constant 0 : i32
    return %arg0, %c0_i32 : i32, i32
  }
  func.func @transform_1(%arg0: i32) -> (i32, i32) {
    %c0_i32 = arith.constant 0 : i32
    %c0_i32_0 = arith.constant 0 : i32
    %c0_i32_1 = arith.constant 0 : i32
    return %c0_i32, %c0_i32_0 : i32, i32
  }
  func.func @transform_2(%arg0: i32) -> (i32, i32) {
    %c0_i32 = arith.constant 0 : i32
    %c0_i32_0 = arith.constant 0 : i32
    %c0_i32_1 = arith.constant 0 : i32
    return %c0_i32, %c0_i32_0 : i32, i32
  }
  func.func @transform_3(%arg0: i32) -> (i32, i32) {
    %c0_i32 = arith.constant 0 : i32
    %c0_i32_0 = arith.constant 0 : i32
    %c0_i32_1 = arith.constant 0 : i32
    return %c0_i32, %c0_i32_0 : i32, i32
  }
  func.func @transform_4(%arg0: i32) -> (i32, i32) {
    %c0_i32 = arith.constant 0 : i32
    %c0_i32_0 = arith.constant 0 : i32
    %c0_i32_1 = arith.constant 0 : i32
    return %c0_i32, %c0_i32_0 : i32, i32
  }
  func.func @transform_5(%arg0: i32) -> (i32, i32) {
    %c0_i32 = arith.constant 0 : i32
    %c0_i32_0 = arith.constant 0 : i32
    %c0_i32_1 = arith.constant 0 : i32
    return %c0_i32, %c0_i32_0 : i32, i32
  }
  func.func @transform_6(%arg0: i32) -> (i32, i32) {
    %c0_i32 = arith.constant 0 : i32
    %c0_i32_0 = arith.constant 0 : i32
    %c0_i32_1 = arith.constant 0 : i32
    return %c0_i32, %c0_i32_0 : i32, i32
  }
  func.func @transform_7(%arg0: i32) -> (i32, i32) {
    %c0_i32 = arith.constant 0 : i32
    %c0_i32_0 = arith.constant 0 : i32
    return %arg0, %c0_i32 : i32, i32
  }
}

</mosaic_0001>

<llo_original>
// kernel: tpu_custom_call.1
$region0: #{tpu_custom_call.1}
  #allocation0 [shape = 'u32[]', space=smem, size = 0x4, offset = 0x4, fixed_abs, tag = 'smem constant byte address 0x4 - core index']
  #allocation1 [shape = 'u32[72,128]{1,0:T(1,128)}', space=vmem, size = 0x9000, scoped, tag = 'internal scratch']
  %s0 = inlined_call_operand.vmem [shape: f32[16,8], index: 0, kind: input, shape index: {}]
  %s1 = inlined_call_operand.vmem [shape: f32[8,256], index: 1, kind: input, shape index: {}]
  %s2 = inlined_call_operand.vmem [shape: f32[1,256], index: 2, kind: input, shape index: {}]
  %s3 = inlined_call_operand.hbm [shape: f32[256,256], index: 3, kind: input, shape index: {}]
  %s4 = inlined_call_operand.vmem [shape: f32[1,256], index: 4, kind: input, shape index: {}]
  %s5 = inlined_call_operand.hbm [shape: f32[256,128], index: 5, kind: input, shape index: {}]
  %s6 = inlined_call_operand.vmem [shape: f32[1,128], index: 6, kind: input, shape index: {}]
  %s7 = inlined_call_operand.hbm [shape: f32[16,128], index: 7, kind: output, shape index: {}]
  %s8 = sld [smem:[#allocation0]]
  $region46: #{tpu_custom_call.1} parent=0
    _
  %s10 = ssub.s32 1, %s8
  %s11 = scalar_select 0, %s10, %s8
  $region1: #{tpu_custom_call.1} parent=0
    #allocation2 [shape = 'u8[262144]{0}', space=vmem, size = 0x40000, scoped, tag = 'input window, operand 3, single buffered']
    #allocation3 [shape = 's32[1]{0}', space=sflag, size = 0x4, scoped, tag = 'scoped memory for tpu_custom_call.1']
    #allocation4 [shape = 's32[1]{0}', space=sflag, size = 0x4, scoped, tag = 'scoped memory for tpu_custom_call.1']
    #allocation5 [shape = 'u8[131072]{0}', space=vmem, size = 0x20000, scoped, tag = 'input window, operand 5, single buffered']
    #allocation6 [shape = 's32[1]{0}', space=sflag, size = 0x4, scoped, tag = 'scoped memory for tpu_custom_call.1']
    #allocation7 [shape = 'u8[8192]{0}', space=vmem, size = 0x2000, scoped, tag = 'output window, operand 0, single buffered']
    %12 = vsyncpa [#allocation3], 0
    %13 = vsyncpa [#allocation6], 0
    %14 = vsyncpa [#allocation4], 0
    // Predicated region
    $region2: #{tpu_custom_call.1} parent=1 // pred_check
      _
    $region3: #{tpu_custom_call.1} parent=1 // pred_check_branch
      %16 = sbr.rel (0) target = $region5
    $region4: #{tpu_custom_call.1} parent=1 // pred_region
      _
    $region5: #{tpu_custom_call.1} parent=1 // pred_fallthru
      _
    // Predicated region
    $region6: #{tpu_custom_call.1} parent=1 // pred_check
      _
    $region7: #{tpu_custom_call.1} parent=1 // pred_check_branch
      %18 = sbr.rel (0) target = $region9
    $region8: #{tpu_custom_call.1} parent=1 // pred_region
      _
    $region9: #{tpu_custom_call.1} parent=1 // pred_fallthru
      _
    // Predicated region
    $region10: #{tpu_custom_call.1} parent=1 // pred_check
      _
    $region11: #{tpu_custom_call.1} parent=1 // pred_check_branch
      %20 = sbr.rel (0) target = $region13
    $region12: #{tpu_custom_call.1} parent=1 // pred_region
      _
    $region13: #{tpu_custom_call.1} parent=1 // pred_fallthru
      _
    // Predicated region
    $region14: #{tpu_custom_call.1} parent=1 // pred_check
      _
    $region15: #{tpu_custom_call.1} parent=1 // pred_check_branch
      %22 = sbr.rel (0) target = $region17
    $region16: #{tpu_custom_call.1} parent=1 // pred_region
      %24 = vsyncadd [#allocation3], 0
      %s25 = sshll.u32 %s3, 4
      %s26 = int_to_ptr.hbm [resolvable:$true] %s25
      %s27 = sshll.u32 [#allocation2], 4
      %s28 = int_to_ptr.vmem [resolvable:$true] %s27
      %33 = dma.hbm_to_vmem [thread:$0]  %s26, 8192, %s28, [#allocation3], 256, 256, 16
    $region17: #{tpu_custom_call.1} parent=1 // pred_fallthru
      _
    // Predicated region
    $region18: #{tpu_custom_call.1} parent=1 // pred_check
      _
    $region19: #{tpu_custom_call.1} parent=1 // pred_check_branch
      %35 = sbr.rel (0) target = $region21
    $region20: #{tpu_custom_call.1} parent=1 // pred_region
      _
    $region21: #{tpu_custom_call.1} parent=1 // pred_fallthru
      _
    // Predicated region
    $region22: #{tpu_custom_call.1} parent=1 // pred_check
      _
    $region23: #{tpu_custom_call.1} parent=1 // pred_check_branch
      %37 = sbr.rel (0) target = $region25
    $region24: #{tpu_custom_call.1} parent=1 // pred_region
      %39 = vsyncadd [#allocation6], 0
      %s40 = sshll.u32 %s5, 4
      %s41 = int_to_ptr.hbm [resolvable:$true] %s40
      %s42 = sshll.u32 [#allocation5], 4
      %s43 = int_to_ptr.vmem [resolvable:$true] %s42
      %48 = dma.hbm_to_vmem [thread:$0]  %s41, 4096, %s43, [#allocation6], 128, 128, 8
    $region25: #{tpu_custom_call.1} parent=1 // pred_fallthru
      _
    // Predicated region
    $region26: #{tpu_custom_call.1} parent=1 // pred_check
      _
    $region27: #{tpu_custom_call.1} parent=1 // pred_check_branch
      %50 = sbr.rel (0) target = $region29
    $region28: #{tpu_custom_call.1} parent=1 // pred_region
      _
    $region29: #{tpu_custom_call.1} parent=1 // pred_fallthru
      _
    // Predicated region
    $region30: #{tpu_custom_call.1} parent=1 // pred_check
      _
    $region31: #{tpu_custom_call.1} parent=1 // pred_check_branch
      %52 = sbr.rel (0) target = $region33
    $region32: #{tpu_custom_call.1} parent=1 // pred_region
      %54 = dma.done [#allocation3], 8192
    $region33: #{tpu_custom_call.1} parent=1 // pred_fallthru
      _
    // Predicated region
    $region34: #{tpu_custom_call.1} parent=1 // pred_check
      _
    $region35: #{tpu_custom_call.1} parent=1 // pred_check_branch
      %56 = sbr.rel (0) target = $region37
    $region36: #{tpu_custom_call.1} parent=1 // pred_region
      %58 = dma.done [#allocation6], 4096
    $region37: #{tpu_custom_call.1} parent=1 // pred_fallthru
      _
    %v59 = vld [vmem:[%s0] sm:$0xff]
    %v60 = vld [vmem:[%s0 + $0x8] sm:$0xff]
    %v61 = vld [vmem:[%s1] sm:$0xff]
    %v62 = vld [vmem:[%s1 + $0x8] sm:$0xff]
    %v63 = vld [vmem:[%s2] sm:$0x3]
    %v65 = vperm.slane %v63, 0
    %v66 = vperm.slane %v63, 1
    %vm69 = vcmask 64512
    %v71 = vsel %vm69, %v59, 0
    %v74 = vsel %vm69, %v60, 0
    %76 = vmatpush.msra.mxu0 0.0
    %77 = vmatpush.msra.mxu0 0.0
    %78 = vmatpush.msra.mxu0 0.0
    %79 = vmatpush.msra.mxu0 0.0
    %80 = vmatpush.msra.mxu0 0.0
    %81 = vmatpush.msra.mxu0 0.0
    %82 = vmatpush.msra.mxu0 0.0
    %83 = vmatpush.msra.mxu0 0.0
    %84 = vmatpush.msra.mxu0 0.0
    %85 = vmatpush.msra.mxu0 0.0
    %86 = vmatpush.msra.mxu0 0.0
    %87 = vmatpush.msra.mxu0 0.0
    %88 = vmatpush.msra.mxu0 0.0
    %89 = vmatpush.msra.mxu0 0.0
    %90 = vmatpush.msra.mxu0 0.0
    %91 = vmatpush.msra.mxu0 %v61
    %92 = vmatmul.f32.gmra.mxu0 %v71
    %v93 = vpop.f32.mrf.mxu0
    %v94 = vadd.f32 %v65, %v93
    %95 = vmatmul.f32.gmra.mxu0 %v74
    %v96 = vpop.f32.mrf.mxu0
    %v97 = vadd.f32 %v65, %v96
    %98 = vdwg.mxu0
    %99 = vmatpush.msra.mxu0 0.0
    %100 = vmatpush.msra.mxu0 0.0
    %101 = vmatpush.msra.mxu0 0.0
    %102 = vmatpush.msra.mxu0 0.0
    %103 = vmatpush.msra.mxu0 0.0
    %104 = vmatpush.msra.mxu0 0.0
    %105 = vmatpush.msra.mxu0 0.0
    %106 = vmatpush.msra.mxu0 0.0
    %107 = vmatpush.msra.mxu0 0.0
    %108 = vmatpush.msra.mxu0 0.0
    %109 = vmatpush.msra.mxu0 0.0
    %110 = vmatpush.msra.mxu0 0.0
    %111 = vmatpush.msra.mxu0 0.0
    %112 = vmatpush.msra.mxu0 0.0
    %113 = vmatpush.msra.mxu0 0.0
    %114 = vmatpush.msra.mxu0 %v62
    %115 = vmatmul.f32.gmra.mxu0 %v71
    %v116 = vpop.f32.mrf.mxu0
    %v117 = vadd.f32 %v66, %v116
    %118 = vmatmul.f32.gmra.mxu0 %v74
    %v119 = vpop.f32.mrf.mxu0
    %v120 = vadd.f32 %v66, %v119
    %121 = vdwg.mxu0
    %v122 = vmax.f32 %v94, 0.0
    %v123 = vmax.f32 %v117, 0.0
    %v124 = vmax.f32 %v97, 0.0
    %v125 = vmax.f32 %v120, 0.0
    %v126 = vld [vmem:[#allocation2] sm:$0xff]
    %v127 = vld [vmem:[#allocation2 + $0x8] sm:$0xff]
    %v128 = vld [vmem:[#allocation2 + $0x10] sm:$0xff]
    %v129 = vld [vmem:[#allocation2 + $0x18] sm:$0xff]
    %v130 = vld [vmem:[#allocation2 + $0x20] sm:$0xff]
    %v131 = vld [vmem:[#allocation2 + $0x28] sm:$0xff]
    %v132 = vld [vmem:[#allocation2 + $0x30] sm:$0xff]
    %v133 = vld [vmem:[#allocation2 + $0x38] sm:$0xff]
    %v134 = vld [vmem:[#allocation2 + $0x40] sm:$0xff]
    %v135 = vld [vmem:[#allocation2 + $0x48] sm:$0xff]
    %v136 = vld [vmem:[#allocation2 + $0x50] sm:$0xff]
    %v137 = vld [vmem:[#allocation2 + $0x58] sm:$0xff]
    %v138 = vld [vmem:[#allocation2 + $0x60] sm:$0xff]
    %v139 = vld [vmem:[#allocation2 + $0x68] sm:$0xff]
    %v140 = vld [vmem:[#allocation2 + $0x70] sm:$0xff]
    %v141 = vld [vmem:[#allocation2 + $0x78] sm:$0xff]
    %v142 = vld [vmem:[#allocation2 + $0x80] sm:$0xff]
    %v143 = vld [vmem:[#allocation2 + $0x88] sm:$0xff]
    %v144 = vld [vmem:[#allocation2 + $0x90] sm:$0xff]
    %v145 = vld [vmem:[#allocation2 + $0x98] sm:$0xff]
    %v146 = vld [vmem:[#allocation2 + $0xa0] sm:$0xff]
    %v147 = vld [vmem:[#allocation2 + $0xa8] sm:$0xff]
    %v148 = vld [vmem:[#allocation2 + $0xb0] sm:$0xff]
    %v149 = vld [vmem:[#allocation2 + $0xb8] sm:$0xff]
    %v150 = vld [vmem:[#allocation2 + $0xc0] sm:$0xff]
    %v151 = vld [vmem:[#allocation2 + $0xc8] sm:$0xff]
    %v152 = vld [vmem:[#allocation2 + $0xd0] sm:$0xff]
    %v153 = vld [vmem:[#allocation2 + $0xd8] sm:$0xff]
    %v154 = vld [vmem:[#allocation2 + $0xe0] sm:$0xff]
    %v155 = vld [vmem:[#allocation2 + $0xe8] sm:$0xff]
    %v156 = vld [vmem:[#allocation2 + $0xf0] sm:$0xff]
    %v157 = vld [vmem:[#allocation2 + $0xf8] sm:$0xff]
    %v158 = vld [vmem:[#allocation2 + $0x100] sm:$0xff]
    %v159 = vld [vmem:[#allocation2 + $0x108] sm:$0xff]
    %v160 = vld [vmem:[#allocation2 + $0x110] sm:$0xff]
    %v161 = vld [vmem:[#allocation2 + $0x118] sm:$0xff]
    %v162 = vld [vmem:[#allocation2 + $0x120] sm:$0xff]
    %v163 = vld [vmem:[#allocation2 + $0x128] sm:$0xff]
    %v164 = vld [vmem:[#allocation2 + $0x130] sm:$0xff]
    %v165 = vld [vmem:[#allocation2 + $0x138] sm:$0xff]
    %v166 = vld [vmem:[#allocation2 + $0x140] sm:$0xff]
    %v167 = vld [vmem:[#allocation2 + $0x148] sm:$0xff]
    %v168 = vld [vmem:[#allocation2 + $0x150] sm:$0xff]
    %v169 = vld [vmem:[#allocation2 + $0x158] sm:$0xff]
    %v170 = vld [vmem:[#allocation2 + $0x160] sm:$0xff]
    %v171 = vld [vmem:[#allocation2 + $0x168] sm:$0xff]
    %v172 = vld [vmem:[#allocation2 + $0x170] sm:$0xff]
    %v173 = vld [vmem:[#allocation2 + $0x178] sm:$0xff]
    %v174 = vld [vmem:[#allocation2 + $0x180] sm:$0xff]
    %v175 = vld [vmem:[#allocation2 + $0x188] sm:$0xff]
    %v176 = vld [vmem:[#allocation2 + $0x190] sm:$0xff]
    %v177 = vld [vmem:[#allocation2 + $0x198] sm:$0xff]
    %v178 = vld [vmem:[#allocation2 + $0x1a0] sm:$0xff]
    %v179 = vld [vmem:[#allocation2 + $0x1a8] sm:$0xff]
    %v180 = vld [vmem:[#allocation2 + $0x1b0] sm:$0xff]
    %v181 = vld [vmem:[#allocation2 + $0x1b8] sm:$0xff]
    %v182 = vld [vmem:[#allocation2 + $0x1c0] sm:$0xff]
    %v183 = vld [vmem:[#allocation2 + $0x1c8] sm:$0xff]
    %v184 = vld [vmem:[#allocation2 + $0x1d0] sm:$0xff]
    %v185 = vld [vmem:[#allocation2 + $0x1d8] sm:$0xff]
    %v186 = vld [vmem:[#allocation2 + $0x1e0] sm:$0xff]
    %v187 = vld [vmem:[#allocation2 + $0x1e8] sm:$0xff]
    %v188 = vld [vmem:[#allocation2 + $0x1f0] sm:$0xff]
    %v189 = vld [vmem:[#allocation2 + $0x1f8] sm:$0xff]
    %v190 = vld [vmem:[%s4] sm:$0x3]
    %v192 = vperm.slane %v190, 0
    %v193 = vperm.slane %v190, 1
    %196 = vmatpush.msra.mxu0 %v156
    %197 = vmatpush.msra.mxu0 %v154
    %198 = vmatpush.msra.mxu0 %v152
    %199 = vmatpush.msra.mxu0 %v150
    %200 = vmatpush.msra.mxu0 %v148
    %201 = vmatpush.msra.mxu0 %v146
    %202 = vmatpush.msra.mxu0 %v144
    %203 = vmatpush.msra.mxu0 %v142
    %204 = vmatpush.msra.mxu0 %v140
    %205 = vmatpush.msra.mxu0 %v138
    %206 = vmatpush.msra.mxu0 %v136
    %207 = vmatpush.msra.mxu0 %v134
    %208 = vmatpush.msra.mxu0 %v132
    %209 = vmatpush.msra.mxu0 %v130
    %210 = vmatpush.msra.mxu0 %v128
    %211 = vmatpush.msra.mxu0 %v126
    %212 = vmatmul.f32.gmra.mxu0 %v122
    %v213 = vpop.f32.mrf.mxu0
    %v214 = vadd.f32 %v192, %v213
    %215 = vmatmul.f32.gmra.mxu0 %v124
    %v216 = vpop.f32.mrf.mxu0
    %v217 = vadd.f32 %v192, %v216
    %218 = vdwg.mxu0
    %219 = vmatpush.msra.mxu0 %v188
    %220 = vmatpush.msra.mxu0 %v186
    %221 = vmatpush.msra.mxu0 %v184
    %222 = vmatpush.msra.mxu0 %v182
    %223 = vmatpush.msra.mxu0 %v180
    %224 = vmatpush.msra.mxu0 %v178
    %225 = vmatpush.msra.mxu0 %v176
    %226 = vmatpush.msra.mxu0 %v174
    %227 = vmatpush.msra.mxu0 %v172
    %228 = vmatpush.msra.mxu0 %v170
    %229 = vmatpush.msra.mxu0 %v168
    %230 = vmatpush.msra.mxu0 %v166
    %231 = vmatpush.msra.mxu0 %v164
    %232 = vmatpush.msra.mxu0 %v162
    %233 = vmatpush.msra.mxu0 %v160
    %234 = vmatpush.msra.mxu0 %v158
    %235 = vmatmul.f32.gmra.mxu0 %v123
    %v236 = vpop.f32.mrf.mxu0
    %v237 = vadd.f32 %v214, %v236
    %238 = vmatmul.f32.gmra.mxu0 %v125
    %v239 = vpop.f32.mrf.mxu0
    %v240 = vadd.f32 %v217, %v239
    %241 = vdwg.mxu0
    %242 = vmatpush.msra.mxu0 %v157
    %243 = vmatpush.msra.mxu0 %v155
    %244 = vmatpush.msra.mxu0 %v153
    %245 = vmatpush.msra.mxu0 %v151
    %246 = vmatpush.msra.mxu0 %v149
    %247 = vmatpush.msra.mxu0 %v147
    %248 = vmatpush.msra.mxu0 %v145
    %249 = vmatpush.msra.mxu0 %v143
    %250 = vmatpush.msra.mxu0 %v141
    %251 = vmatpush.msra.mxu0 %v139
    %252 = vmatpush.msra.mxu0 %v137
    %253 = vmatpush.msra.mxu0 %v135
    %254 = vmatpush.msra.mxu0 %v133
    %255 = vmatpush.msra.mxu0 %v131
    %256 = vmatpush.msra.mxu0 %v129
    %257 = vmatpush.msra.mxu0 %v127
    %258 = vmatmul.f32.gmra.mxu0 %v122
    %v259 = vpop.f32.mrf.mxu0
    %v260 = vadd.f32 %v193, %v259
    %261 = vmatmul.f32.gmra.mxu0 %v124
    %v262 = vpop.f32.mrf.mxu0
    %v263 = vadd.f32 %v193, %v262
    %264 = vdwg.mxu0
    %265 = vmatpush.msra.mxu0 %v189
    %266 = vmatpush.msra.mxu0 %v187
    %267 = vmatpush.msra.mxu0 %v185
    %268 = vmatpush.msra.mxu0 %v183
    %269 = vmatpush.msra.mxu0 %v181
    %270 = vmatpush.msra.mxu0 %v179
    %271 = vmatpush.msra.mxu0 %v177
    %272 = vmatpush.msra.mxu0 %v175
    %273 = vmatpush.msra.mxu0 %v173
    %274 = vmatpush.msra.mxu0 %v171
    %275 = vmatpush.msra.mxu0 %v169
    %276 = vmatpush.msra.mxu0 %v167
    %277 = vmatpush.msra.mxu0 %v165
    %278 = vmatpush.msra.mxu0 %v163
    %279 = vmatpush.msra.mxu0 %v161
    %280 = vmatpush.msra.mxu0 %v159
    %281 = vmatmul.f32.gmra.mxu0 %v123
    %v282 = vpop.f32.mrf.mxu0
    %v283 = vadd.f32 %v260, %v282
    %284 = vmatmul.f32.gmra.mxu0 %v125
    %v285 = vpop.f32.mrf.mxu0
    %v286 = vadd.f32 %v263, %v285
    %287 = vdwg.mxu0
    %v288 = vmax.f32 %v237, 0.0
    %v289 = vmax.f32 %v283, 0.0
    %v290 = vmax.f32 %v240, 0.0
    %v291 = vmax.f32 %v286, 0.0
    %v292 = vld [vmem:[#allocation5] sm:$0xff]
    %v293 = vld [vmem:[#allocation5 + $0x8] sm:$0xff]
    %v294 = vld [vmem:[#allocation5 + $0x10] sm:$0xff]
    %v295 = vld [vmem:[#allocation5 + $0x18] sm:$0xff]
    %v296 = vld [vmem:[#allocation5 + $0x20] sm:$0xff]
    %v297 = vld [vmem:[#allocation5 + $0x28] sm:$0xff]
    %v298 = vld [vmem:[#allocation5 + $0x30] sm:$0xff]
    %v299 = vld [vmem:[#allocation5 + $0x38] sm:$0xff]
    %v300 = vld [vmem:[#allocation5 + $0x40] sm:$0xff]
    %v301 = vld [vmem:[#allocation5 + $0x48] sm:$0xff]
    %v302 = vld [vmem:[#allocation5 + $0x50] sm:$0xff]
    %v303 = vld [vmem:[#allocation5 + $0x58] sm:$0xff]
    %v304 = vld [vmem:[#allocation5 + $0x60] sm:$0xff]
    %v305 = vld [vmem:[#allocation5 + $0x68] sm:$0xff]
    %v306 = vld [vmem:[#allocation5 + $0x70] sm:$0xff]
    %v307 = vld [vmem:[#allocation5 + $0x78] sm:$0xff]
    %v308 = vld [vmem:[#allocation5 + $0x80] sm:$0xff]
    %v309 = vld [vmem:[#allocation5 + $0x88] sm:$0xff]
    %v310 = vld [vmem:[#allocation5 + $0x90] sm:$0xff]
    %v311 = vld [vmem:[#allocation5 + $0x98] sm:$0xff]
    %v312 = vld [vmem:[#allocation5 + $0xa0] sm:$0xff]
    %v313 = vld [vmem:[#allocation5 + $0xa8] sm:$0xff]
    %v314 = vld [vmem:[#allocation5 + $0xb0] sm:$0xff]
    %v315 = vld [vmem:[#allocation5 + $0xb8] sm:$0xff]
    %v316 = vld [vmem:[#allocation5 + $0xc0] sm:$0xff]
    %v317 = vld [vmem:[#allocation5 + $0xc8] sm:$0xff]
    %v318 = vld [vmem:[#allocation5 + $0xd0] sm:$0xff]
    %v319 = vld [vmem:[#allocation5 + $0xd8] sm:$0xff]
    %v320 = vld [vmem:[#allocation5 + $0xe0] sm:$0xff]
    %v321 = vld [vmem:[#allocation5 + $0xe8] sm:$0xff]
    %v322 = vld [vmem:[#allocation5 + $0xf0] sm:$0xff]
    %v323 = vld [vmem:[#allocation5 + $0xf8] sm:$0xff]
    %v324 = vld [vmem:[%s6] sm:$0x1]
    %v326 = vperm.slane %v324, 0
    %328 = vmatpush.msra.mxu0 %v307
    %329 = vmatpush.msra.mxu0 %v306
    %330 = vmatpush.msra.mxu0 %v305
    %331 = vmatpush.msra.mxu0 %v304
    %332 = vmatpush.msra.mxu0 %v303
    %333 = vmatpush.msra.mxu0 %v302
    %334 = vmatpush.msra.mxu0 %v301
    %335 = vmatpush.msra.mxu0 %v300
    %336 = vmatpush.msra.mxu0 %v299
    %337 = vmatpush.msra.mxu0 %v298
    %338 = vmatpush.msra.mxu0 %v297
    %339 = vmatpush.msra.mxu0 %v296
    %340 = vmatpush.msra.mxu0 %v295
    %341 = vmatpush.msra.mxu0 %v294
    %342 = vmatpush.msra.mxu0 %v293
    %343 = vmatpush.msra.mxu0 %v292
    %344 = vmatmul.f32.gmra.mxu0 %v288
    %v345 = vpop.f32.mrf.mxu0
    %v346 = vadd.f32 %v326, %v345
    %347 = vmatmul.f32.gmra.mxu0 %v290
    %v348 = vpop.f32.mrf.mxu0
    %v349 = vadd.f32 %v326, %v348
    %350 = vdwg.mxu0
    %351 = vmatpush.msra.mxu0 %v323
    %352 = vmatpush.msra.mxu0 %v322
    %353 = vmatpush.msra.mxu0 %v321
    %354 = vmatpush.msra.mxu0 %v320
    %355 = vmatpush.msra.mxu0 %v319
    %356 = vmatpush.msra.mxu0 %v318
    %357 = vmatpush.msra.mxu0 %v317
    %358 = vmatpush.msra.mxu0 %v316
    %359 = vmatpush.msra.mxu0 %v315
    %360 = vmatpush.msra.mxu0 %v314
    %361 = vmatpush.msra.mxu0 %v313
    %362 = vmatpush.msra.mxu0 %v312
    %363 = vmatpush.msra.mxu0 %v311
    %364 = vmatpush.msra.mxu0 %v310
    %365 = vmatpush.msra.mxu0 %v309
    %366 = vmatpush.msra.mxu0 %v308
    %367 = vmatmul.f32.gmra.mxu0 %v289
    %v368 = vpop.f32.mrf.mxu0
    %v369 = vadd.f32 %v346, %v368
    %370 = vmatmul.f32.gmra.mxu0 %v291
    %v371 = vpop.f32.mrf.mxu0
    %v372 = vadd.f32 %v349, %v371
    %373 = vdwg.mxu0
    %v374 = vlaneseq
    %v375 = vand.u32 %v374, 127
    %v376 = vmax.f32 %v369, -20.0
    %v377 = vmax.f32 %v372, -20.0
    %v378 = vmin.f32 %v376, 2.0
    %v379 = vmin.f32 %v377, 2.0
    %v380 = vmul.f32 %v378, 1.442695
    %v381 = vpow.pop %v380
    %v382 = vmul.f32 %v379, 1.442695
    %v383 = vpow.pop %v382
    %vm384 = vcmp.lt.s32.totalorder %v375, 2
    %v385 = vsel %vm384, %v369, %v381
    %v386 = vsel %vm384, %v372, %v383
    %387 = vst [vmem:[#allocation7] sm:$0xff] %v385
    %388 = vst [vmem:[#allocation7 + $0x8] sm:$0xff] %v386
    // Predicated region
    $region38: #{tpu_custom_call.1} parent=1 // pred_check
      _
    $region39: #{tpu_custom_call.1} parent=1 // pred_check_branch
      %390 = sbr.rel (0) target = $region41
    $region40: #{tpu_custom_call.1} parent=1 // pred_region
      %392 = vsyncadd [#allocation4], 0
      %s393 = sshll.u32 [#allocation7], 4
      %s394 = int_to_ptr.vmem [resolvable:$true] %s393
      %s395 = sshll.u32 %s7, 4
      %s396 = int_to_ptr.hbm [resolvable:$true] %s395
      %401 = dma.vmem_to_hbm [thread:$0]  %s394, 256, %s396, [#allocation4], 128, 128, 8
    $region41: #{tpu_custom_call.1} parent=1 // pred_fallthru
      _
    // Predicated region
    $region42: #{tpu_custom_call.1} parent=1 // pred_check
      _
    $region43: #{tpu_custom_call.1} parent=1 // pred_check_branch
      %403 = sbr.rel (0) target = $region45
    $region44: #{tpu_custom_call.1} parent=1 // pred_region
      %405 = dma.done [#allocation4], 256
    $region45: #{tpu_custom_call.1} parent=1 // pred_fallthru
      _
    %406 = vsyncpa [#allocation3], 1
    %407 = vsyncpa [#allocation6], 1
    %408 = vsyncpa [#allocation4], 1

// kernel: tpu_custom_call.1
$region0: #{tpu_custom_call.1}
  #allocation0 [shape = 'u32[]', space=smem, size = 0x4, offset = 0x4, fixed_abs, tag = 'smem constant byte address 0x4 - core index']
  #allocation1 [shape = 'u32[72,128]{1,0:T(1,128)}', space=vmem, size = 0x9000, scoped, tag = 'internal scratch']
  %s0 = inlined_call_operand.vmem [shape: f32[16,8], index: 0, kind: input, shape index: {}]
  %s1 = inlined_call_operand.vmem [shape: f32[8,256], index: 1, kind: input, shape index: {}]
  %s2 = inlined_call_operand.vmem [shape: f32[1,256], index: 2, kind: input, shape index: {}]
  %s3 = inlined_call_operand.hbm [shape: f32[256,256], index: 3, kind: input, shape index: {}]
  %s4 = inlined_call_operand.vmem [shape: f32[1,256], index: 4, kind: input, shape index: {}]
  %s5 = inlined_call_operand.hbm [shape: f32[256,128], index: 5, kind: input, shape index: {}]
  %s6 = inlined_call_operand.vmem [shape: f32[1,128], index: 6, kind: input, shape index: {}]
  %s7 = inlined_call_operand.hbm [shape: f32[16,128], index: 7, kind: output, shape index: {}]
  %s8 = sld [smem:[#allocation0]]
  $region46: #{tpu_custom_call.1} parent=0
    _
  %s10 = ssub.s32 1, %s8
  %s11 = scalar_select 0, %s10, %s8
  $region1: #{tpu_custom_call.1} parent=0
    #allocation2 [shape = 'u8[262144]{0}', space=vmem, size = 0x40000, scoped, tag = 'input window, operand 3, single buffered']
    #allocation3 [shape = 's32[1]{0}', space=sflag, size = 0x4, scoped, tag = 'scoped memory for tpu_custom_call.1']
    #allocation4 [shape = 's32[1]{0}', space=sflag, size = 0x4, scoped, tag = 'scoped memory for tpu_custom_call.1']
    #allocation5 [shape = 'u8[131072]{0}', space=vmem, size = 0x20000, scoped, tag = 'input window, operand 5, single buffered']
    #allocation6 [shape = 's32[1]{0}', space=sflag, size = 0x4, scoped, tag = 'scoped memory for tpu_custom_call.1']
    #allocation7 [shape = 'u8[8192]{0}', space=vmem, size = 0x2000, scoped, tag = 'output window, operand 0, single buffered']
    %12 = vsyncpa [#allocation3], 0
    %13 = vsyncpa [#allocation6], 0
    %14 = vsyncpa [#allocation4], 0
    // Predicated region
    $region2: #{tpu_custom_call.1} parent=1 // pred_check
      _
    $region3: #{tpu_custom_call.1} parent=1 // pred_check_branch
      %16 = sbr.rel (0) target = $region5
    $region4: #{tpu_custom_call.1} parent=1 // pred_region
      _
    $region5: #{tpu_custom_call.1} parent=1 // pred_fallthru
      _
    // Predicated region
    $region6: #{tpu_custom_call.1} parent=1 // pred_check
      _
    $region7: #{tpu_custom_call.1} parent=1 // pred_check_branch
      %18 = sbr.rel (0) target = $region9
    $region8: #{tpu_custom_call.1} parent=1 // pred_region
      _
    $region9: #{tpu_custom_call.1} parent=1 // pred_fallthru
      _
    // Predicated region
    $region10: #{tpu_custom_call.1} parent=1 // pred_check
      _
    $region11: #{tpu_custom_call.1} parent=1 // pred_check_branch
      %20 = sbr.rel (0) target = $region13
    $region12: #{tpu_custom_call.1} parent=1 // pred_region
      _
    $region13: #{tpu_custom_call.1} parent=1 // pred_fallthru
      _
    // Predicated region
    $region14: #{tpu_custom_call.1} parent=1 // pred_check
      _
    $region15: #{tpu_custom_call.1} parent=1 // pred_check_branch
      %22 = sbr.rel (0) target = $region17
    $region16: #{tpu_custom_call.1} parent=1 // pred_region
      %24 = vsyncadd [#allocation3], 0
      %s25 = sshll.u32 %s3, 4
      %s26 = int_to_ptr.hbm [resolvable:$true] %s25
      %s27 = sshll.u32 [#allocation2], 4
      %s28 = int_to_ptr.vmem [resolvable:$true] %s27
      %33 = dma.hbm_to_vmem [thread:$0]  %s26, 8192, %s28, [#allocation3], 256, 256, 16
    $region17: #{tpu_custom_call.1} parent=1 // pred_fallthru
      _
    // Predicated region
    $region18: #{tpu_custom_call.1} parent=1 // pred_check
      _
    $region19: #{tpu_custom_call.1} parent=1 // pred_check_branch
      %35 = sbr.rel (0) target = $region21
    $region20: #{tpu_custom_call.1} parent=1 // pred_region
      _
    $region21: #{tpu_custom_call.1} parent=1 // pred_fallthru
      _
    // Predicated region
    $region22: #{tpu_custom_call.1} parent=1 // pred_check
      _
    $region23: #{tpu_custom_call.1} parent=1 // pred_check_branch
      %37 = sbr.rel (0) target = $region25
    $region24: #{tpu_custom_call.1} parent=1 // pred_region
      %39 = vsyncadd [#allocation6], 0
      %s40 = sshll.u32 %s5, 4
      %s41 = int_to_ptr.hbm [resolvable:$true] %s40
      %s42 = sshll.u32 [#allocation5], 4
      %s43 = int_to_ptr.vmem [resolvable:$true] %s42
      %48 = dma.hbm_to_vmem [thread:$0]  %s41, 4096, %s43, [#allocation6], 128, 128, 8
    $region25: #{tpu_custom_call.1} parent=1 // pred_fallthru
      _
    // Predicated region
    $region26: #{tpu_custom_call.1} parent=1 // pred_check
      _
    $region27: #{tpu_custom_call.1} parent=1 // pred_check_branch
      %50 = sbr.rel (0) target = $region29
    $region28: #{tpu_custom_call.1} parent=1 // pred_region
      _
    $region29: #{tpu_custom_call.1} parent=1 // pred_fallthru
      _
    // Predicated region
    $region30: #{tpu_custom_call.1} parent=1 // pred_check
      _
    $region31: #{tpu_custom_call.1} parent=1 // pred_check_branch
      %52 = sbr.rel (0) target = $region33
    $region32: #{tpu_custom_call.1} parent=1 // pred_region
      %54 = dma.done [#allocation3], 8192
    $region33: #{tpu_custom_call.1} parent=1 // pred_fallthru
      _
    // Predicated region
    $region34: #{tpu_custom_call.1} parent=1 // pred_check
      _
    $region35: #{tpu_custom_call.1} parent=1 // pred_check_branch
      %56 = sbr.rel (0) target = $region37
    $region36: #{tpu_custom_call.1} parent=1 // pred_region
      %58 = dma.done [#allocation6], 4096
    $region37: #{tpu_custom_call.1} parent=1 // pred_fallthru
      _
    %v59 = vld [vmem:[%s0] sm:$0xff]
    %v60 = vld [vmem:[%s0 + $0x8] sm:$0xff]
    %v61 = vld [vmem:[%s1] sm:$0xff]
    %v62 = vld [vmem:[%s1 + $0x8] sm:$0xff]
    %v63 = vld [vmem:[%s2] sm:$0x3]
    %v65 = vperm.slane %v63, 0
    %v66 = vperm.slane %v63, 1
    %vm69 = vcmask 64512
    %v71 = vsel %vm69, %v59, 0
    %v74 = vsel %vm69, %v60, 0
    %76 = vmatpush.msra.mxu0 0.0
    %77 = vmatpush.msra.mxu0 0.0
    %78 = vmatpush.msra.mxu0 0.0
    %79 = vmatpush.msra.mxu0 0.0
    %80 = vmatpush.msra.mxu0 0.0
    %81 = vmatpush.msra.mxu0 0.0
    %82 = vmatpush.msra.mxu0 0.0
    %83 = vmatpush.msra.mxu0 0.0
    %84 = vmatpush.msra.mxu0 0.0
    %85 = vmatpush.msra.mxu0 0.0
    %86 = vmatpush.msra.mxu0 0.0
    %87 = vmatpush.msra.mxu0 0.0
    %88 = vmatpush.msra.mxu0 0.0
    %89 = vmatpush.msra.mxu0 0.0
    %90 = vmatpush.msra.mxu0 0.0
    %91 = vmatpush.msra.mxu0 %v61
    %92 = vmatmul.f32.gmra.mxu0 %v71
    %v93 = vpop.f32.mrf.mxu0
    %v94 = vadd.f32 %v65, %v93
    %95 = vmatmul.f32.gmra.mxu0 %v74
    %v96 = vpop.f32.mrf.mxu0
    %v97 = vadd.f32 %v65, %v96
    %98 = vdwg.mxu0
    %99 = vmatpush.msra.mxu0 0.0
    %100 = vmatpush.msra.mxu0 0.0
    %101 = vmatpush.msra.mxu0 0.0
    %102 = vmatpush.msra.mxu0 0.0
    %103 = vmatpush.msra.mxu0 0.0
    %104 = vmatpush.msra.mxu0 0.0
    %105 = vmatpush.msra.mxu0 0.0
    %106 = vmatpush.msra.mxu0 0.0
    %107 = vmatpush.msra.mxu0 0.0
    %108 = vmatpush.msra.mxu0 0.0
    %109 = vmatpush.msra.mxu0 0.0
    %110 = vmatpush.msra.mxu0 0.0
    %111 = vmatpush.msra.mxu0 0.0
    %112 = vmatpush.msra.mxu0 0.0
    %113 = vmatpush.msra.mxu0 0.0
    %114 = vmatpush.msra.mxu0 %v62
    %115 = vmatmul.f32.gmra.mxu0 %v71
    %v116 = vpop.f32.mrf.mxu0
    %v117 = vadd.f32 %v66, %v116
    %118 = vmatmul.f32.gmra.mxu0 %v74
    %v119 = vpop.f32.mrf.mxu0
    %v120 = vadd.f32 %v66, %v119
    %121 = vdwg.mxu0
    %v122 = vmax.f32 %v94, 0.0
    %v123 = vmax.f32 %v117, 0.0
    %v124 = vmax.f32 %v97, 0.0
    %v125 = vmax.f32 %v120, 0.0
    %v126 = vld [vmem:[#allocation2] sm:$0xff]
    %v127 = vld [vmem:[#allocation2 + $0x8] sm:$0xff]
    %v128 = vld [vmem:[#allocation2 + $0x10] sm:$0xff]
    %v129 = vld [vmem:[#allocation2 + $0x18] sm:$0xff]
    %v130 = vld [vmem:[#allocation2 + $0x20] sm:$0xff]
    %v131 = vld [vmem:[#allocation2 + $0x28] sm:$0xff]
    %v132 = vld [vmem:[#allocation2 + $0x30] sm:$0xff]
    %v133 = vld [vmem:[#allocation2 + $0x38] sm:$0xff]
    %v134 = vld [vmem:[#allocation2 + $0x40] sm:$0xff]
    %v135 = vld [vmem:[#allocation2 + $0x48] sm:$0xff]
    %v136 = vld [vmem:[#allocation2 + $0x50] sm:$0xff]
    %v137 = vld [vmem:[#allocation2 + $0x58] sm:$0xff]
    %v138 = vld [vmem:[#allocation2 + $0x60] sm:$0xff]
    %v139 = vld [vmem:[#allocation2 + $0x68] sm:$0xff]
    %v140 = vld [vmem:[#allocation2 + $0x70] sm:$0xff]
    %v141 = vld [vmem:[#allocation2 + $0x78] sm:$0xff]
    %v142 = vld [vmem:[#allocation2 + $0x80] sm:$0xff]
    %v143 = vld [vmem:[#allocation2 + $0x88] sm:$0xff]
    %v144 = vld [vmem:[#allocation2 + $0x90] sm:$0xff]
    %v145 = vld [vmem:[#allocation2 + $0x98] sm:$0xff]
    %v146 = vld [vmem:[#allocation2 + $0xa0] sm:$0xff]
    %v147 = vld [vmem:[#allocation2 + $0xa8] sm:$0xff]
    %v148 = vld [vmem:[#allocation2 + $0xb0] sm:$0xff]
    %v149 = vld [vmem:[#allocation2 + $0xb8] sm:$0xff]
    %v150 = vld [vmem:[#allocation2 + $0xc0] sm:$0xff]
    %v151 = vld [vmem:[#allocation2 + $0xc8] sm:$0xff]
    %v152 = vld [vmem:[#allocation2 + $0xd0] sm:$0xff]
    %v153 = vld [vmem:[#allocation2 + $0xd8] sm:$0xff]
    %v154 = vld [vmem:[#allocation2 + $0xe0] sm:$0xff]
    %v155 = vld [vmem:[#allocation2 + $0xe8] sm:$0xff]
    %v156 = vld [vmem:[#allocation2 + $0xf0] sm:$0xff]
    %v157 = vld [vmem:[#allocation2 + $0xf8] sm:$0xff]
    %v158 = vld [vmem:[#allocation2 + $0x100] sm:$0xff]
    %v159 = vld [vmem:[#allocation2 + $0x108] sm:$0xff]
    %v160 = vld [vmem:[#allocation2 + $0x110] sm:$0xff]
    %v161 = vld [vmem:[#allocation2 + $0x118] sm:$0xff]
    %v162 = vld [vmem:[#allocation2 + $0x120] sm:$0xff]
    %v163 = vld [vmem:[#allocation2 + $0x128] sm:$0xff]
    %v164 = vld [vmem:[#allocation2 + $0x130] sm:$0xff]
    %v165 = vld [vmem:[#allocation2 + $0x138] sm:$0xff]
    %v166 = vld [vmem:[#allocation2 + $0x140] sm:$0xff]
    %v167 = vld [vmem:[#allocation2 + $0x148] sm:$0xff]
    %v168 = vld [vmem:[#allocation2 + $0x150] sm:$0xff]
    %v169 = vld [vmem:[#allocation2 + $0x158] sm:$0xff]
    %v170 = vld [vmem:[#allocation2 + $0x160] sm:$0xff]
    %v171 = vld [vmem:[#allocation2 + $0x168] sm:$0xff]
    %v172 = vld [vmem:[#allocation2 + $0x170] sm:$0xff]
    %v173 = vld [vmem:[#allocation2 + $0x178] sm:$0xff]
    %v174 = vld [vmem:[#allocation2 + $0x180] sm:$0xff]
    %v175 = vld [vmem:[#allocation2 + $0x188] sm:$0xff]
    %v176 = vld [vmem:[#allocation2 + $0x190] sm:$0xff]
    %v177 = vld [vmem:[#allocation2 + $0x198] sm:$0xff]
    %v178 = vld [vmem:[#allocation2 + $0x1a0] sm:$0xff]
    %v179 = vld [vmem:[#allocation2 + $0x1a8] sm:$0xff]
    %v180 = vld [vmem:[#allocation2 + $0x1b0] sm:$0xff]
    %v181 = vld [vmem:[#allocation2 + $0x1b8] sm:$0xff]
    %v182 = vld [vmem:[#allocation2 + $0x1c0] sm:$0xff]
    %v183 = vld [vmem:[#allocation2 + $0x1c8] sm:$0xff]
    %v184 = vld [vmem:[#allocation2 + $0x1d0] sm:$0xff]
    %v185 = vld [vmem:[#allocation2 + $0x1d8] sm:$0xff]
    %v186 = vld [vmem:[#allocation2 + $0x1e0] sm:$0xff]
    %v187 = vld [vmem:[#allocation2 + $0x1e8] sm:$0xff]
    %v188 = vld [vmem:[#allocation2 + $0x1f0] sm:$0xff]
    %v189 = vld [vmem:[#allocation2 + $0x1f8] sm:$0xff]
    %v190 = vld [vmem:[%s4] sm:$0x3]
    %v192 = vperm.slane %v190, 0
    %v193 = vperm.slane %v190, 1
    %196 = vmatpush.msra.mxu0 %v156
    %197 = vmatpush.msra.mxu0 %v154
    %198 = vmatpush.msra.mxu0 %v152
    %199 = vmatpush.msra.mxu0 %v150
    %200 = vmatpush.msra.mxu0 %v148
    %201 = vmatpush.msra.mxu0 %v146
    %202 = vmatpush.msra.mxu0 %v144
    %203 = vmatpush.msra.mxu0 %v142
    %204 = vmatpush.msra.mxu0 %v140
    %205 = vmatpush.msra.mxu0 %v138
    %206 = vmatpush.msra.mxu0 %v136
    %207 = vmatpush.msra.mxu0 %v134
    %208 = vmatpush.msra.mxu0 %v132
    %209 = vmatpush.msra.mxu0 %v130
    %210 = vmatpush.msra.mxu0 %v128
    %211 = vmatpush.msra.mxu0 %v126
    %212 = vmatmul.f32.gmra.mxu0 %v122
    %v213 = vpop.f32.mrf.mxu0
    %v214 = vadd.f32 %v192, %v213
    %215 = vmatmul.f32.gmra.mxu0 %v124
    %v216 = vpop.f32.mrf.mxu0
    %v217 = vadd.f32 %v192, %v216
    %218 = vdwg.mxu0
    %219 = vmatpush.msra.mxu0 %v188
    %220 = vmatpush.msra.mxu0 %v186
    %221 = vmatpush.msra.mxu0 %v184
    %222 = vmatpush.msra.mxu0 %v182
    %223 = vmatpush.msra.mxu0 %v180
    %224 = vmatpush.msra.mxu0 %v178
    %225 = vmatpush.msra.mxu0 %v176
    %226 = vmatpush.msra.mxu0 %v174
    %227 = vmatpush.msra.mxu0 %v172
    %228 = vmatpush.msra.mxu0 %v170
    %229 = vmatpush.msra.mxu0 %v168
    %230 = vmatpush.msra.mxu0 %v166
    %231 = vmatpush.msra.mxu0 %v164
    %232 = vmatpush.msra.mxu0 %v162
    %233 = vmatpush.msra.mxu0 %v160
    %234 = vmatpush.msra.mxu0 %v158
    %235 = vmatmul.f32.gmra.mxu0 %v123
    %v236 = vpop.f32.mrf.mxu0
    %v237 = vadd.f32 %v214, %v236
    %238 = vmatmul.f32.gmra.mxu0 %v125
    %v239 = vpop.f32.mrf.mxu0
    %v240 = vadd.f32 %v217, %v239
    %241 = vdwg.mxu0
    %242 = vmatpush.msra.mxu0 %v157
    %243 = vmatpush.msra.mxu0 %v155
    %244 = vmatpush.msra.mxu0 %v153
    %245 = vmatpush.msra.mxu0 %v151
    %246 = vmatpush.msra.mxu0 %v149
    %247 = vmatpush.msra.mxu0 %v147
    %248 = vmatpush.msra.mxu0 %v145
    %249 = vmatpush.msra.mxu0 %v143
    %250 = vmatpush.msra.mxu0 %v141
    %251 = vmatpush.msra.mxu0 %v139
    %252 = vmatpush.msra.mxu0 %v137
    %253 = vmatpush.msra.mxu0 %v135
    %254 = vmatpush.msra.mxu0 %v133
    %255 = vmatpush.msra.mxu0 %v131
    %256 = vmatpush.msra.mxu0 %v129
    %257 = vmatpush.msra.mxu0 %v127
    %258 = vmatmul.f32.gmra.mxu0 %v122
    %v259 = vpop.f32.mrf.mxu0
    %v260 = vadd.f32 %v193, %v259
    %261 = vmatmul.f32.gmra.mxu0 %v124
    %v262 = vpop.f32.mrf.mxu0
    %v263 = vadd.f32 %v193, %v262
    %264 = vdwg.mxu0
    %265 = vmatpush.msra.mxu0 %v189
    %266 = vmatpush.msra.mxu0 %v187
    %267 = vmatpush.msra.mxu0 %v185
    %268 = vmatpush.msra.mxu0 %v183
    %269 = vmatpush.msra.mxu0 %v181
    %270 = vmatpush.msra.mxu0 %v179
    %271 = vmatpush.msra.mxu0 %v177
    %272 = vmatpush.msra.mxu0 %v175
    %273 = vmatpush.msra.mxu0 %v173
    %274 = vmatpush.msra.mxu0 %v171
    %275 = vmatpush.msra.mxu0 %v169
    %276 = vmatpush.msra.mxu0 %v167
    %277 = vmatpush.msra.mxu0 %v165
    %278 = vmatpush.msra.mxu0 %v163
    %279 = vmatpush.msra.mxu0 %v161
    %280 = vmatpush.msra.mxu0 %v159
    %281 = vmatmul.f32.gmra.mxu0 %v123
    %v282 = vpop.f32.mrf.mxu0
    %v283 = vadd.f32 %v260, %v282
    %284 = vmatmul.f32.gmra.mxu0 %v125
    %v285 = vpop.f32.mrf.mxu0
    %v286 = vadd.f32 %v263, %v285
    %287 = vdwg.mxu0
    %v288 = vmax.f32 %v237, 0.0
    %v289 = vmax.f32 %v283, 0.0
    %v290 = vmax.f32 %v240, 0.0
    %v291 = vmax.f32 %v286, 0.0
    %v292 = vld [vmem:[#allocation5] sm:$0xff]
    %v293 = vld [vmem:[#allocation5 + $0x8] sm:$0xff]
    %v294 = vld [vmem:[#allocation5 + $0x10] sm:$0xff]
    %v295 = vld [vmem:[#allocation5 + $0x18] sm:$0xff]
    %v296 = vld [vmem:[#allocation5 + $0x20] sm:$0xff]
    %v297 = vld [vmem:[#allocation5 + $0x28] sm:$0xff]
    %v298 = vld [vmem:[#allocation5 + $0x30] sm:$0xff]
    %v299 = vld [vmem:[#allocation5 + $0x38] sm:$0xff]
    %v300 = vld [vmem:[#allocation5 + $0x40] sm:$0xff]
    %v301 = vld [vmem:[#allocation5 + $0x48] sm:$0xff]
    %v302 = vld [vmem:[#allocation5 + $0x50] sm:$0xff]
    %v303 = vld [vmem:[#allocation5 + $0x58] sm:$0xff]
    %v304 = vld [vmem:[#allocation5 + $0x60] sm:$0xff]
    %v305 = vld [vmem:[#allocation5 + $0x68] sm:$0xff]
    %v306 = vld [vmem:[#allocation5 + $0x70] sm:$0xff]
    %v307 = vld [vmem:[#allocation5 + $0x78] sm:$0xff]
    %v308 = vld [vmem:[#allocation5 + $0x80] sm:$0xff]
    %v309 = vld [vmem:[#allocation5 + $0x88] sm:$0xff]
    %v310 = vld [vmem:[#allocation5 + $0x90] sm:$0xff]
    %v311 = vld [vmem:[#allocation5 + $0x98] sm:$0xff]
    %v312 = vld [vmem:[#allocation5 + $0xa0] sm:$0xff]
    %v313 = vld [vmem:[#allocation5 + $0xa8] sm:$0xff]
    %v314 = vld [vmem:[#allocation5 + $0xb0] sm:$0xff]
    %v315 = vld [vmem:[#allocation5 + $0xb8] sm:$0xff]
    %v316 = vld [vmem:[#allocation5 + $0xc0] sm:$0xff]
    %v317 = vld [vmem:[#allocation5 + $0xc8] sm:$0xff]
    %v318 = vld [vmem:[#allocation5 + $0xd0] sm:$0xff]
    %v319 = vld [vmem:[#allocation5 + $0xd8] sm:$0xff]
    %v320 = vld [vmem:[#allocation5 + $0xe0] sm:$0xff]
    %v321 = vld [vmem:[#allocation5 + $0xe8] sm:$0xff]
    %v322 = vld [vmem:[#allocation5 + $0xf0] sm:$0xff]
    %v323 = vld [vmem:[#allocation5 + $0xf8] sm:$0xff]
    %v324 = vld [vmem:[%s6] sm:$0x1]
    %v326 = vperm.slane %v324, 0
    %328 = vmatpush.msra.mxu0 %v307
    %329 = vmatpush.msra.mxu0 %v306
    %330 = vmatpush.msra.mxu0 %v305
    %331 = vmatpush.msra.mxu0 %v304
    %332 = vmatpush.msra.mxu0 %v303
    %333 = vmatpush.msra.mxu0 %v302
    %334 = vmatpush.msra.mxu0 %v301
    %335 = vmatpush.msra.mxu0 %v300
    %336 = vmatpush.msra.mxu0 %v299
    %337 = vmatpush.msra.mxu0 %v298
    %338 = vmatpush.msra.mxu0 %v297
    %339 = vmatpush.msra.mxu0 %v296
    %340 = vmatpush.msra.mxu0 %v295
    %341 = vmatpush.msra.mxu0 %v294
    %342 = vmatpush.msra.mxu0 %v293
    %343 = vmatpush.msra.mxu0 %v292
    %344 = vmatmul.f32.gmra.mxu0 %v288
    %v345 = vpop.f32.mrf.mxu0
    %v346 = vadd.f32 %v326, %v345
    %347 = vmatmul.f32.gmra.mxu0 %v290
    %v348 = vpop.f32.mrf.mxu0
    %v349 = vadd.f32 %v326, %v348
    %350 = vdwg.mxu0
    %351 = vmatpush.msra.mxu0 %v323
    %352 = vmatpush.msra.mxu0 %v322
    %353 = vmatpush.msra.mxu0 %v321
    %354 = vmatpush.msra.mxu0 %v320
    %355 = vmatpush.msra.mxu0 %v319
    %356 = vmatpush.msra.mxu0 %v318
    %357 = vmatpush.msra.mxu0 %v317
    %358 = vmatpush.msra.mxu0 %v316
    %359 = vmatpush.msra.mxu0 %v315
    %360 = vmatpush.msra.mxu0 %v314
    %361 = vmatpush.msra.mxu0 %v313
    %362 = vmatpush.msra.mxu0 %v312
    %363 = vmatpush.msra.mxu0 %v311
    %364 = vmatpush.msra.mxu0 %v310
    %365 = vmatpush.msra.mxu0 %v309
    %366 = vmatpush.msra.mxu0 %v308
    %367 = vmatmul.f32.gmra.mxu0 %v289
    %v368 = vpop.f32.mrf.mxu0
    %v369 = vadd.f32 %v346, %v368
    %370 = vmatmul.f32.gmra.mxu0 %v291
    %v371 = vpop.f32.mrf.mxu0
    %v372 = vadd.f32 %v349, %v371
    %373 = vdwg.mxu0
    %v374 = vlaneseq
    %v375 = vand.u32 %v374, 127
    %v376 = vmax.f32 %v369, -20.0
    %v377 = vmax.f32 %v372, -20.0
    %v378 = vmin.f32 %v376, 2.0
    %v379 = vmin.f32 %v377, 2.0
    %v380 = vmul.f32 %v378, 1.442695
    %v381 = vpow.pop %v380
    %v382 = vmul.f32 %v379, 1.442695
    %v383 = vpow.pop %v382
    %vm384 = vcmp.lt.s32.totalorder %v375, 2
    %v385 = vsel %vm384, %v369, %v381
    %v386 = vsel %vm384, %v372, %v383
    %387 = vst [vmem:[#allocation7] sm:$0xff] %v385
    %388 = vst [vmem:[#allocation7 + $0x8] sm:$0xff] %v386
    // Predicated region
    $region38: #{tpu_custom_call.1} parent=1 // pred_check
      _
    $region39: #{tpu_custom_call.1} parent=1 // pred_check_branch
      %390 = sbr.rel (0) target = $region41
    $region40: #{tpu_custom_call.1} parent=1 // pred_region
      %392 = vsyncadd [#allocation4], 0
      %s393 = sshll.u32 [#allocation7], 4
      %s394 = int_to_ptr.vmem [resolvable:$true] %s393
      %s395 = sshll.u32 %s7, 4
      %s396 = int_to_ptr.hbm [resolvable:$true] %s395
      %401 = dma.vmem_to_hbm [thread:$0]  %s394, 256, %s396, [#allocation4], 128, 128, 8
    $region41: #{tpu_custom_call.1} parent=1 // pred_fallthru
      _
    // Predicated region
    $region42: #{tpu_custom_call.1} parent=1 // pred_check
      _
    $region43: #{tpu_custom_call.1} parent=1 // pred_check_branch
      %403 = sbr.rel (0) target = $region45
    $region44: #{tpu_custom_call.1} parent=1 // pred_region
      %405 = dma.done [#allocation4], 256
    $region45: #{tpu_custom_call.1} parent=1 // pred_fallthru
      _
    %406 = vsyncpa [#allocation3], 1
    %407 = vsyncpa [#allocation6], 1
    %408 = vsyncpa [#allocation4], 1

</llo_original>
